<compile_context>
chip_gen: v6e
topology: v6e:2x2x1
jax: 0.10.0
libtpu: 0.0.40
codegen_flags: <defaults>
</compile_context>

<pallas_src>
import functools

import jax
import jax.numpy as jnp
from jax.experimental import pallas as pl
from jax.experimental.pallas import tpu as pltpu


def _per_elem_loss(x, t):
    """Numerically-stable BCE-with-logits, elementwise, in f32."""
    x = x.astype(jnp.float32)
    # single select instead of (t != 0).astype(f32) followed by x * y
    xy = jnp.where(t != 0, x, 0.0)
    return jnp.maximum(x, 0.0) - xy + jnp.log1p(jnp.exp(-jnp.abs(x)))


def _bce_kernel(x_ref, t_ref, o_ref, *, num_blocks):
    """Accumulate per-parallel-slice column partial sums of the BCE loss.

    x_ref, t_ref : (br, bc) logits / raw targets (native dtypes).
    o_ref        : (1, 8, bc) f32 output block owned by this parallel slice;
                   its index_map is constant along the inner "arbitrary" axis,
                   so it stays resident in VMEM and doubles as the accumulator.
    """
    c = pl.program_id(0)          # parallel slice (a TensorCore on v7x)
    j = pl.program_id(1)          # sequential row-block step within the slice
    steps = pl.num_programs(1)

    @pl.when(j == 0)
    def _init():
        o_ref[...] = jnp.zeros_like(o_ref)

    # When the number of row blocks is not a multiple of the parallel width,
    # the (clamped, re-fetched) padding steps must contribute nothing.
    @pl.when(c * steps + j < num_blocks)
    def _accumulate():
        x = x_ref[...].astype(jnp.float32)          # upcast in-kernel (VPU)
        per = _per_elem_loss(x, t_ref[...])
        # Collapse only the untiled leading axis: static 8-row slices are free
        # views and the adds are full-vreg VALU ops — no cross-sublane XLU work
        # and no masked-sublane stores in the hot loop.
        part = per[0:8, :]
        for r0 in range(8, per.shape[0], 8):
            part = part + per[r0:r0 + 8, :]
        o_ref[...] += part[None, :, :]


def my_bce_with_logits(outputs: jax.Array, targets: jax.Array, *,
                       block_rows: int = 1024, block_cols: int | None = None,
                       num_cores: int = 2, min_pallas_elems: int = 65536) -> jax.Array:
    """JAX/Pallas equivalent of MyBCEWithLogit.forward (mean BCE-with-logits)."""
    # torch .squeeze(dim=-1): only squeezes if the last dim is exactly 1.
    if outputs.ndim >= 1 and outputs.shape[-1] == 1:
        outputs = jnp.squeeze(outputs, axis=-1)
    assert outputs.shape == targets.shape, "BCE requires identical shapes after squeeze"

    n = int(outputs.size)

    # bool targets: keep a 1-byte conversion (see TODO at top of file).
    t = targets.astype(jnp.int8) if targets.dtype == jnp.bool_ else targets

    x_flat = outputs.reshape(-1)      # row-major flatten: free
    t_flat = t.reshape(-1)

    # Tiny inputs: XLA's fused reduce beats kernel launch / per-step overhead.
    if n < max(min_pallas_elems, 32 * 128):
        return jnp.mean(_per_elem_loss(x_flat, t_flat))

    # ---- lane width (bc): largest of {1024,512,256,128} dividing n ---------
    if block_cols is None:
        bc = 1024
        for cand in (1024, 512, 256, 128):
            if n % cand == 0:
                bc = cand
                break
    else:
        bc = int(block_cols)
    assert bc % 128 == 0, "block_cols must be a multiple of 128 lanes"

    rows_all = n // bc
    if rows_all < 32:
        return jnp.mean(_per_elem_loss(x_flat, t_flat))

    # ---- row block (br): multiple of 32 so f32 / bf16 / int8 all tile ------
    br = min(int(block_rows), (rows_all // 32) * 32)
    br = max(32, (br // 32) * 32)

    num_blocks = rows_all // br       # full (br, bc) blocks handled in-kernel
    rows_k = num_blocks * br
    n_k = rows_k * bc                 # elements processed by the kernel

    # ---- 2-D lane-dense view of the kernel portion -------------------------
    if n % bc == 0:
        # Free reshape, no copy, no pad; the grid never touches rows >= rows_k.
        x2 = x_flat.reshape(rows_all, bc)
        t2 = t_flat.reshape(rows_all, bc)
    else:
        # Ragged n (n % 128 != 0): a prefix slice is unavoidable for a 2-D
        # view; this replaces the old full-array sentinel pad.
        x2 = x_flat[:n_k].reshape(rows_k, bc)
        t2 = t_flat[:n_k].reshape(rows_k, bc)

    # ---- grid: (parallel slices) x (sequential row blocks per slice) -------
    n_par = max(1, min(int(num_cores), num_blocks))
    steps = pl.cdiv(num_blocks, n_par)

    def in_map(c, j):
        # Clamp so the (at most n_par-1) padding steps re-fetch a valid block;
        # their contribution is skipped inside the kernel.
        return (jnp.minimum(c * steps + j, num_blocks - 1), 0)

    x_bytes = x2.dtype.itemsize
    t_bytes = t2.dtype.itemsize
    cost = pl.CostEstimate(
        flops=8 * n_k,
        transcendentals=2 * n_k,
        bytes_accessed=n_k * (x_bytes + t_bytes) + n_par * 8 * bc * 4,
    )
    # Double-buffered working set (+ headroom); >= 32 MiB so bigger blocks
    # clear v5e's 16 MiB scoped default, still far under v7x's 64 MiB physical.
    footprint = 2 * br * bc * (x_bytes + t_bytes) + 2 * 8 * bc * 4
    vmem_limit = max(32 * 1024 * 1024, footprint + 8 * 1024 * 1024)

    kernel = functools.partial(_bce_kernel, num_blocks=num_blocks)
    out = pl.pallas_call(
        kernel,
        out_shape=jax.ShapeDtypeStruct((n_par, 8, bc), jnp.float32),
        grid=(n_par, steps),
        in_specs=[
            pl.BlockSpec((br, bc), in_map),
            pl.BlockSpec((br, bc), in_map),
        ],
        out_specs=pl.BlockSpec((1, 8, bc), lambda c, j: (c, 0, 0)),
        compiler_params=pltpu.CompilerParams(
            dimension_semantics=("parallel", "arbitrary"),
            vmem_limit_bytes=int(vmem_limit),
        ),
        cost_estimate=cost,
    )(x2, t2)

    total = jnp.sum(out)
    if n_k < n:
        # Remainder (< one block + one row): cheap plain-JAX pass, folded in
        # before the 1/n scale — no full-array pad / copy.
        total = total + jnp.sum(_per_elem_loss(x_flat[n_k:], t_flat[n_k:]))
    return total / n


def _reference(outputs: jax.Array, targets: jax.Array) -> jax.Array:
    if outputs.ndim >= 1 and outputs.shape[-1] == 1:
        outputs = jnp.squeeze(outputs, axis=-1)
    x = outputs.astype(jnp.float32)
    y = (targets != 0).astype(jnp.float32)
    return jnp.mean(jnp.maximum(x, 0.0) - x * y + jnp.log1p(jnp.exp(-jnp.abs(x))))


if __name__ == "__main__":
    key = jax.random.PRNGKey(0)
    k = jax.random.split(key, 10)

    # A: ragged n (n % 128 != 0) -> prefix-slice main + tiny plain-JAX tail;
    #    multi-step grid on both parallel slices; f32 logits, int8 targets.
    n_a = 24593
    out_a = jax.random.normal(k[0], (n_a, 1), dtype=jnp.float32)
    tgt_a = jax.random.randint(k[1], (n_a,), 0, 3, dtype=jnp.int32).astype(jnp.int8)
    loss_a = jax.block_until_ready(my_bce_with_logits(
        out_a, tgt_a, block_rows=32, block_cols=256, min_pallas_elems=1024))
    ref_a = _reference(out_a, tgt_a)
    assert jnp.allclose(loss_a, ref_a, rtol=1e-5, atol=1e-6), (loss_a, ref_a)

    # B: copy-free path (n divisible by bc), bf16 logits, float targets with
    #    exact zeros and fractional values (0.5 -> class 1, as in PyTorch).
    n_b = 24576
    out_b = jax.random.normal(k[2], (n_b, 1), dtype=jnp.float32).astype(jnp.bfloat16)
    raw = jax.random.uniform(k[3], (n_b,), dtype=jnp.float32)
    tgt_b = jnp.where(raw < 0.4, 0.0, raw)
    loss_b = jax.block_until_ready(my_bce_with_logits(
        out_b, tgt_b, block_rows=32, block_cols=256, min_pallas_elems=1024))
    ref_b = _reference(out_b, tgt_b)
    assert jnp.allclose(loss_b, ref_b, rtol=1e-5, atol=1e-6), (loss_b, ref_b)

    # C: copy-free path with leftover rows (rows not a multiple of block_rows)
    #    -> kernel covers the full blocks, small suffix handled in plain JAX.
    n_c = 25600
    out_c = jax.random.normal(k[4], (n_c, 1), dtype=jnp.float32)
    tgt_c = jax.random.randint(k[5], (n_c,), 0, 3, dtype=jnp.int32)
    loss_c = jax.block_until_ready(my_bce_with_logits(
        out_c, tgt_c, block_rows=32, block_cols=256, min_pallas_elems=1024))
    ref_c = _reference(out_c, tgt_c)
    assert jnp.allclose(loss_c, ref_c, rtol=1e-5, atol=1e-6), (loss_c, ref_c)

    # D: default block / core configuration (adaptive bc = 1024, single block).
    n_d = 65536
    out_d = jax.random.normal(k[6], (n_d, 1), dtype=jnp.float32)
    tgt_d = jax.random.randint(k[7], (n_d,), 0, 2, dtype=jnp.int32)
    loss_d = jax.block_until_ready(my_bce_with_logits(out_d, tgt_d))
    ref_d = _reference(out_d, tgt_d)
    assert jnp.allclose(loss_d, ref_d, rtol=1e-5, atol=1e-6), (loss_d, ref_d)

    # E: tiny input -> plain-JAX fallback (kernel overhead not worth it).
    out_e = jax.random.normal(k[8], (16, 1), dtype=jnp.float32)
    tgt_e = jax.random.randint(k[9], (16,), 0, 3, dtype=jnp.int32)
    loss_e = jax.block_until_ready(my_bce_with_logits(out_e, tgt_e))
    ref_e = _reference(out_e, tgt_e)
    assert jnp.allclose(loss_e, ref_e, rtol=1e-5, atol=1e-6), (loss_e, ref_e)

    print("KERNEL_OK")
</pallas_src>

<mosaic_0001>
module attributes {stable_mosaic.version = 11 : i64} {
  func.func @_bce_kernel(%arg0: i32, %arg1: i32, %arg2: memref<32x256xf32, #tpu.memory_space<vmem>>, %arg3: memref<32x256xi8, #tpu.memory_space<vmem>>, %arg4: memref<1x8x256xf32, #tpu.memory_space<vmem>>) attributes {dimension_semantics = [#tpu.dimension_semantics<parallel>, #tpu.dimension_semantics<arbitrary>], iteration_bounds = array<i64: 2, 2>, scalar_prefetch = 0 : i64, scratch_operands = 0 : i64, tpu.core_type = #tpu.core_type<tc>, window_params = [{transform_indices = @transform_0, window_bounds = array<i64: 32, 256>}, {transform_indices = @transform_1, window_bounds = array<i64: 32, 256>}, {transform_indices = @transform_2, window_bounds = array<i64: 1, 8, 256>}]} {
    %c0_i32 = arith.constant 0 : i32
    %0 = arith.cmpi eq, %arg1, %c0_i32 : i32
    %1 = arith.extui %0 : i1 to i32
    %c0_i32_0 = arith.constant 0 : i32
    %2 = arith.cmpi ne, %1, %c0_i32_0 : i32
    scf.if %2 {
      %cst = arith.constant 0.000000e+00 : f32
      %8 = vector.broadcast %cst : f32 to vector<1x8x256xf32>
      %c0 = arith.constant 0 : index
      %c0_2 = arith.constant 0 : index
      %c0_3 = arith.constant 0 : index
      %9 = vector.load %arg4[%c0, %c0_2, %c0_3] : memref<1x8x256xf32, #tpu.memory_space<vmem>>, vector<1x8x256xf32>
      tpu.vector_store %arg4[%c0, %c0_2, %c0_3], %8 {strides = array<i32>} : memref<1x8x256xf32, #tpu.memory_space<vmem>>, vector<1x8x256xf32>,
    } else {
    }
    %c2_i32 = arith.constant 2 : i32
    %3 = arith.muli %arg0, %c2_i32 : i32
    %4 = arith.addi %3, %arg1 : i32
    %c3_i32 = arith.constant 3 : i32
    %5 = arith.cmpi slt, %4, %c3_i32 : i32
    %6 = arith.extui %5 : i1 to i32
    %c0_i32_1 = arith.constant 0 : i32
    %7 = arith.cmpi ne, %6, %c0_i32_1 : i32
    scf.if %7 {
      %c0 = arith.constant 0 : index
      %c0_2 = arith.constant 0 : index
      %8 = vector.load %arg2[%c0, %c0_2] : memref<32x256xf32, #tpu.memory_space<vmem>>, vector<32x256xf32>
      %c0_3 = arith.constant 0 : index
      %c0_4 = arith.constant 0 : index
      %9 = vector.load %arg3[%c0_3, %c0_4] : memref<32x256xi8, #tpu.memory_space<vmem>>, vector<32x256xi8>
      %c0_i8 = arith.constant 0 : i8
      %10 = vector.broadcast %c0_i8 : i8 to vector<32x256xi8>
      %11 = arith.cmpi ne, %9, %10 : vector<32x256xi8>
      %cst = arith.constant 0.000000e+00 : f32
      %12 = vector.broadcast %cst : f32 to vector<32x256xf32>
      %13 = arith.select %11, %8, %12 : vector<32x256xi1>, vector<32x256xf32>
      %cst_5 = arith.constant 0.000000e+00 : f32
      %14 = vector.broadcast %cst_5 : f32 to vector<32x256xf32>
      %15 = arith.maximumf %8, %14 : vector<32x256xf32>
      %16 = arith.subf %15, %13 : vector<32x256xf32>
      %17 = math.absf %8 : vector<32x256xf32>
      %cst_6 = arith.constant 0.000000e+00 : f32
      %18 = vector.broadcast %cst_6 : f32 to vector<32x256xf32>
      %19 = arith.subf %18, %17 : vector<32x256xf32>
      %20 = math.exp %19 : vector<32x256xf32>
      %21 = math.log1p %20 : vector<32x256xf32>
      %22 = arith.addf %16, %21 : vector<32x256xf32>
      %23 = vector.extract_strided_slice %22 {offsets = [0, 0], sizes = [8, 256], strides = [1, 1]} : vector<32x256xf32> to vector<8x256xf32>
      %24 = vector.extract_strided_slice %22 {offsets = [8, 0], sizes = [8, 256], strides = [1, 1]} : vector<32x256xf32> to vector<8x256xf32>
      %25 = arith.addf %23, %24 : vector<8x256xf32>
      %26 = vector.extract_strided_slice %22 {offsets = [16, 0], sizes = [8, 256], strides = [1, 1]} : vector<32x256xf32> to vector<8x256xf32>
      %27 = arith.addf %25, %26 : vector<8x256xf32>
      %28 = vector.extract_strided_slice %22 {offsets = [24, 0], sizes = [8, 256], strides = [1, 1]} : vector<32x256xf32> to vector<8x256xf32>
      %29 = arith.addf %27, %28 : vector<8x256xf32>
      %c0_7 = arith.constant 0 : index
      %c0_8 = arith.constant 0 : index
      %c0_9 = arith.constant 0 : index
      %30 = vector.load %arg4[%c0_7, %c0_8, %c0_9] : memref<1x8x256xf32, #tpu.memory_space<vmem>>, vector<1x8x256xf32>
      %31 = vector.shape_cast %29 : vector<8x256xf32> to vector<1x8x256xf32>
      %32 = arith.addf %30, %31 : vector<1x8x256xf32>
      %c0_10 = arith.constant 0 : index
      %c0_11 = arith.constant 0 : index
      %c0_12 = arith.constant 0 : index
      %33 = vector.load %arg4[%c0_10, %c0_11, %c0_12] : memref<1x8x256xf32, #tpu.memory_space<vmem>>, vector<1x8x256xf32>
      tpu.vector_store %arg4[%c0_10, %c0_11, %c0_12], %32 {strides = array<i32>} : memref<1x8x256xf32, #tpu.memory_space<vmem>>, vector<1x8x256xf32>,
    } else {
    }
    return
  }
  func.func @transform_0(%arg0: i32, %arg1: i32) -> (i32, i32) {
    %c2_i32 = arith.constant 2 : i32
    %0 = arith.muli %arg0, %c2_i32 : i32
    %1 = arith.addi %0, %arg1 : i32
    %c2_i32_0 = arith.constant 2 : i32
    %2 = arith.minsi %1, %c2_i32_0 : i32
    %c0_i32 = arith.constant 0 : i32
    %c0_i32_1 = arith.constant 0 : i32
    return %2, %c0_i32 : i32, i32
  }
  func.func @transform_1(%arg0: i32, %arg1: i32) -> (i32, i32) {
    %c2_i32 = arith.constant 2 : i32
    %0 = arith.muli %arg0, %c2_i32 : i32
    %1 = arith.addi %0, %arg1 : i32
    %c2_i32_0 = arith.constant 2 : i32
    %2 = arith.minsi %1, %c2_i32_0 : i32
    %c0_i32 = arith.constant 0 : i32
    %c0_i32_1 = arith.constant 0 : i32
    return %2, %c0_i32 : i32, i32
  }
  func.func @transform_2(%arg0: i32, %arg1: i32) -> (i32, i32, i32) {
    %c0_i32 = arith.constant 0 : i32
    %c0_i32_0 = arith.constant 0 : i32
    %c0_i32_1 = arith.constant 0 : i32
    return %arg0, %c0_i32, %c0_i32_0 : i32, i32, i32
  }
}

</mosaic_0001>

<llo_original>
// kernel: tpu_custom_call.1
$region0: #{tpu_custom_call.1}
  #allocation0 [shape = 'u32[]', space=smem, size = 0x4, offset = 0x4, fixed_abs, tag = 'smem constant byte address 0x4 - core index']
  #allocation1 [shape = 'u32[144,128]{1,0:T(1,128)}', space=vmem, size = 0x12000, scoped, tag = 'internal scratch']
  %s0 = inlined_call_operand.hbm [shape: f32[96,256], index: 0, kind: input, shape index: {}]
  %s1 = inlined_call_operand.hbm [shape: s8[96,256], index: 1, kind: input, shape index: {}]
  %s2 = inlined_call_operand.hbm [shape: f32[2,8,256], index: 2, kind: output, shape index: {}]
  %s3 = sld [smem:[#allocation0]]
  $region57: #{tpu_custom_call.1} parent=0
    _
  %s5 = ssub.s32 1, %s3
  %s6 = scalar_select 0, %s5, %s3
  $region1: #{tpu_custom_call.1} parent=0
    #allocation2 [shape = 'u8[65536]{0}', space=vmem, size = 0x10000, scoped, tag = 'input window, operand 0']
    #allocation3 [shape = 's32[2]{0}', space=sflag, size = 0x8, scoped, tag = 'scoped memory for tpu_custom_call.1']
    #allocation4 [shape = 's32[2]{0}', space=sflag, size = 0x8, scoped, tag = 'scoped memory for tpu_custom_call.1']
    #allocation5 [shape = 'u8[16384]{0}', space=vmem, size = 0x4000, scoped, tag = 'input window, operand 1']
    #allocation6 [shape = 's32[2]{0}', space=sflag, size = 0x8, scoped, tag = 'scoped memory for tpu_custom_call.1']
    #allocation7 [shape = 'u8[16384]{0}', space=vmem, size = 0x4000, scoped, tag = 'output window, operand 0']
    %7 = vsyncpa [#allocation3], 0
    %s8 = scalar_lea.sflag [#allocation3], 1
    %9 = vsyncpa %s8, 0
    %10 = vsyncpa [#allocation6], 0
    %s11 = scalar_lea.sflag [#allocation6], 1
    %12 = vsyncpa %s11, 0
    %13 = vsyncpa [#allocation4], 0
    %s14 = scalar_lea.sflag [#allocation4], 1
    %15 = vsyncpa %s14, 0
    loop: start=0, step=1, limit=6
    $region2: #{tpu_custom_call.1} parent=1 // loop_pre_header
      _
    $region3: #{tpu_custom_call.1} parent=1 // loop_header
      %s17 = sphi 0, %s21
      %p18 = scmp.ge.s32.totalorder %s17, 6
      %s24 = sphi 0, %s36
      %s25 = sphi 0, %s32
      %s26 = sphi 0, %s24
      %s27 = sphi 0, %s25
      %s28 = sphi 0, %s26
      %s29 = sphi 0, %s27
      %s47 = sphi 0, %s49
      %s50 = sphi 0, %s47
      %s51 = sphi 0, %s50
      %s67 = sphi 0, %s51
      %s81 = sphi 0, %s83
      %s84 = sphi 0, %s81
      %s85 = sphi 0, %s84
      %s101 = sphi 0, %s85
      %s107 = sphi 0, %s109
      %s110 = sphi 0, %s107
      %s111 = sphi 0, %s110
      %s127 = sphi 0, %s111
    $region4: #{tpu_custom_call.1} parent=1 // loop_header_branch
      %20 = sbr.rel (%p18) target = $region8
    $region5: #{tpu_custom_call.1} parent=1 // loop_body
      %s22 = ssub.s32 %s17, 1
      %s23 = ssub.s32 %s17, 2
      %s30 = sadd.s32 1, %s25
      %p31 = scmp.ge.s32.totalorder %s30, 2
      %s32 = scalar_select %p31, 0, %s30
      %s33 = sadd.s32 1, %s24
      %s34 = scalar_select %p31, %s33, %s24
      %p35 = scmp.ge.s32.totalorder %s34, 2
      %s36 = scalar_select %p35, 0, %s34
      %s37 = smul.u32 %s24, 2
      %s38 = sadd.s32 %s37, %s25
      %p39 = scmp.lt.s32.totalorder %s38, 2
      %s40 = scalar_select %p39, %s38, 2
      %s41 = smul.u32 %s36, 2
      %s42 = sadd.s32 %s41, %s32
      %p43 = scmp.lt.s32.totalorder %s42, 2
      %s44 = scalar_select %p43, %s42, 2
      %s45 = ssub.s32 %s40, %s44
      %p46 = scmp.eq.s32.totalorder %s45, 0
      %s48 = sadd.s32 %s47, 1
      %s49 = scalar_select %p46, %s47, %s48
      %p52 = pneg %p46
      %p53 = scmp.eq.s32.totalorder %s17, 3
      %p54 = por %p52, %p53
      %p55 = scmp.ne.s32.totalorder %s47, %s50
      %p56 = scmp.eq.s32.totalorder %s17, 0
      %p57 = por %p55, %p56
      %p58 = scmp.ne.s32.totalorder %s47, %s50
      %p59 = scmp.eq.s32.totalorder %s22, 3
      %p60 = por %p58, %p59
      %p61 = scmp.ne.s32.totalorder %s50, %s51
      %p62 = scmp.eq.s32.totalorder %s22, 0
      %p63 = por %p61, %p62
      %p64 = scmp.ne.s32.totalorder %s50, %s51
      %p65 = scmp.eq.s32.totalorder %s23, 3
      %p66 = por %p64, %p65
      %p68 = scmp.ne.s32.totalorder %s51, %s67
      %p69 = scmp.eq.s32.totalorder %s23, 0
      %p70 = por %p68, %p69
      %s71 = smul.u32 %s24, 2
      %s72 = sadd.s32 %s71, %s25
      %p73 = scmp.lt.s32.totalorder %s72, 2
      %s74 = scalar_select %p73, %s72, 2
      %s75 = smul.u32 %s36, 2
      %s76 = sadd.s32 %s75, %s32
      %p77 = scmp.lt.s32.totalorder %s76, 2
      %s78 = scalar_select %p77, %s76, 2
      %s79 = ssub.s32 %s74, %s78
      %p80 = scmp.eq.s32.totalorder %s79, 0
      %s82 = sadd.s32 %s81, 1
      %s83 = scalar_select %p80, %s81, %s82
      %p86 = pneg %p80
      %p87 = scmp.eq.s32.totalorder %s17, 3
      %p88 = por %p86, %p87
      %p89 = scmp.ne.s32.totalorder %s81, %s84
      %p90 = scmp.eq.s32.totalorder %s17, 0
      %p91 = por %p89, %p90
      %p92 = scmp.ne.s32.totalorder %s81, %s84
      %p93 = scmp.eq.s32.totalorder %s22, 3
      %p94 = por %p92, %p93
      %p95 = scmp.ne.s32.totalorder %s84, %s85
      %p96 = scmp.eq.s32.totalorder %s22, 0
      %p97 = por %p95, %p96
      %p98 = scmp.ne.s32.totalorder %s84, %s85
      %p99 = scmp.eq.s32.totalorder %s23, 3
      %p100 = por %p98, %p99
      %p102 = scmp.ne.s32.totalorder %s85, %s101
      %p103 = scmp.eq.s32.totalorder %s23, 0
      %p104 = por %p102, %p103
      %s105 = ssub.s32 %s24, %s36
      %p106 = scmp.eq.s32.totalorder %s105, 0
      %s108 = sadd.s32 %s107, 1
      %s109 = scalar_select %p106, %s107, %s108
      %p112 = pneg %p106
      %p113 = scmp.eq.s32.totalorder %s17, 3
      %p114 = por %p112, %p113
      %p115 = scmp.ne.s32.totalorder %s107, %s110
      %p116 = scmp.eq.s32.totalorder %s17, 0
      %p117 = por %p115, %p116
      %p118 = scmp.ne.s32.totalorder %s107, %s110
      %p119 = scmp.eq.s32.totalorder %s22, 3
      %p120 = por %p118, %p119
      %p121 = scmp.ne.s32.totalorder %s110, %s111
      %p122 = scmp.eq.s32.totalorder %s22, 0
      %p123 = por %p121, %p122
      %p124 = scmp.ne.s32.totalorder %s110, %s111
      %p125 = scmp.eq.s32.totalorder %s23, 3
      %p126 = por %p124, %p125
      %p128 = scmp.ne.s32.totalorder %s111, %s127
      %p129 = scmp.eq.s32.totalorder %s23, 0
      %p130 = por %p128, %p129
      %p131 = scmp.le.s32.totalorder 1, %s17
      %p132 = scmp.lt.s32.totalorder %s17, 5
      %p133 = pnand %p131, %p132
      %p134 = pneg %p133
      // Predicated region
      $region9: #{tpu_custom_call.1} parent=5 // pred_check
        _
      $region10: #{tpu_custom_call.1} parent=5 // pred_check_branch
        %136 = sbr.rel (%p133) target = $region12
      $region11: #{tpu_custom_call.1} parent=5 // pred_region
        %s137 = ssub.s32 %s17, 1
      $region12: #{tpu_custom_call.1} parent=5 // pred_fallthru
        _
      %p138 = scmp.lt.s32.totalorder %s17, 4
      // Predicated region
      $region13: #{tpu_custom_call.1} parent=5 // pred_check
        %p139 = pneg %p138
      $region14: #{tpu_custom_call.1} parent=5 // pred_check_branch
        %141 = sbr.rel (%p139) target = $region16
      $region15: #{tpu_custom_call.1} parent=5 // pred_region
        // Predicated region
        $region17: #{tpu_custom_call.1} parent=15 // pred_check
          %p142 = pneg %p57
        $region18: #{tpu_custom_call.1} parent=15 // pred_check_branch
          %144 = sbr.rel (%p142) target = $region20
        $region19: #{tpu_custom_call.1} parent=15 // pred_region
          %s145 = sand.u32 %s47, 1
          %s146 = scalar_lea.sflag [#allocation3], %s145
          %s147 = sand.u32 %s47, 1
          %s148 = smul.addr %s147, 64
          %s149 = scalar_lea.vmem [#allocation2], %s148
          %s150 = smul.u32 %s24, 2
          %s151 = sadd.s32 %s150, %s25
          %p152 = scmp.lt.s32.totalorder %s151, 2
          %s153 = scalar_select %p152, %s151, 2
          %s154 = smul.u32 4, %s153
          %s156 = ssub.s32 1024, 1024
          %157 = vsyncadd %s146, %s156
          %s158 = smul.addr %s154, 2
          %s159 = smul.addr %s158, 128
          %s160 = scalar_lea.hbm %s0, %s159
          %s161 = sshll.u32 %s149, 4
          %s162 = int_to_ptr.vmem [resolvable:$true] %s161
          %167 = dma.hbm_to_vmem [thread:$0]  %s160, 1024, %s162, %s146, 256, 256, 16
        $region20: #{tpu_custom_call.1} parent=15 // pred_fallthru
          _
        // Predicated region
        $region21: #{tpu_custom_call.1} parent=15 // pred_check
          %p168 = pneg %p91
        $region22: #{tpu_custom_call.1} parent=15 // pred_check_branch
          %170 = sbr.rel (%p168) target = $region24
        $region23: #{tpu_custom_call.1} parent=15 // pred_region
          %s171 = sand.u32 %s81, 1
          %s172 = scalar_lea.sflag [#allocation6], %s171
          %s173 = sand.u32 %s81, 1
          %s174 = smul.addr %s173, 16
          %s175 = scalar_lea.vmem [#allocation5], %s174
          %s176 = smul.u32 %s24, 2
          %s177 = sadd.s32 %s176, %s25
          %p178 = scmp.lt.s32.totalorder %s177, 2
          %s179 = scalar_select %p178, %s177, 2
          %s181 = ssub.s32 256, 256
          %182 = vsyncadd %s172, %s181
          %s183 = smul.addr %s179, 2
          %s184 = smul.addr %s183, 128
          %s185 = scalar_lea.hbm %s1, %s184
          %s187 = sshll.u32 %s175, 4
          %s188 = int_to_ptr.vmem [resolvable:$true] %s187
          %190 = dma.hbm_to_vmem [thread:$0]  %s185, 256, %s188, %s172
        $region24: #{tpu_custom_call.1} parent=15 // pred_fallthru
          _
      $region16: #{tpu_custom_call.1} parent=5 // pred_fallthru
        _
      %p191 = scmp.le.s32.totalorder 1, %s17
      %p192 = scmp.lt.s32.totalorder %s17, 5
      %p193 = pnand %p191, %p192
      %p194 = pneg %p193
      // Predicated region
      $region25: #{tpu_custom_call.1} parent=5 // pred_check
        _
      $region26: #{tpu_custom_call.1} parent=5 // pred_check_branch
        %196 = sbr.rel (%p193) target = $region28
      $region27: #{tpu_custom_call.1} parent=5 // pred_region
        %s197 = ssub.s32 %s17, 1
        %s198 = sand.u32 %s50, 1
        %s199 = scalar_lea.sflag [#allocation3], %s198
        %s200 = sand.u32 %s50, 1
        %s201 = smul.addr %s200, 64
        %s202 = scalar_lea.vmem [#allocation2], %s201
        // Predicated region
        $region29: #{tpu_custom_call.1} parent=27 // pred_check
          %p203 = pneg %p63
        $region30: #{tpu_custom_call.1} parent=27 // pred_check_branch
          %205 = sbr.rel (%p203) target = $region32
        $region31: #{tpu_custom_call.1} parent=27 // pred_region
          %206 = dma.done %s199, 1024
        $region32: #{tpu_custom_call.1} parent=27 // pred_fallthru
          _
        %s207 = sand.u32 %s84, 1
        %s208 = scalar_lea.sflag [#allocation6], %s207
        %s209 = sand.u32 %s84, 1
        %s210 = smul.addr %s209, 16
        %s211 = scalar_lea.vmem [#allocation5], %s210
        // Predicated region
        $region33: #{tpu_custom_call.1} parent=27 // pred_check
          %p212 = pneg %p97
        $region34: #{tpu_custom_call.1} parent=27 // pred_check_branch
          %214 = sbr.rel (%p212) target = $region36
        $region35: #{tpu_custom_call.1} parent=27 // pred_region
          %215 = dma.done %s208, 256
        $region36: #{tpu_custom_call.1} parent=27 // pred_fallthru
          _
        %s216 = sand.u32 %s50, 1
        %s217 = scalar_lea.sflag [#allocation3], %s216
        %s218 = sand.u32 %s50, 1
        %s219 = smul.addr %s218, 64
        %s220 = scalar_lea.vmem [#allocation2], %s219
        %p221 = pneg %p63
        %p222 = pneg %p60
        %s223 = sand.u32 %s84, 1
        %s224 = scalar_lea.sflag [#allocation6], %s223
        %s225 = sand.u32 %s84, 1
        %s226 = smul.addr %s225, 16
        %s227 = scalar_lea.vmem [#allocation5], %s226
        %p228 = pneg %p97
        %p229 = pneg %p94
        %p230 = pneg %p123
        %p231 = pneg %p120
        %s232 = sand.u32 %s110, 1
        %s233 = scalar_lea.sflag [#allocation4], %s232
        %s234 = sand.u32 %s110, 1
        %s235 = smul.addr %s234, 16
        %s236 = scalar_lea.vmem [#allocation7], %s235
        %s237 = smul.u32 %s26, 2
        %s238 = sadd.s32 %s237, %s27
        %p239 = scmp.lt.s32.totalorder %s238, 2
        %s240 = scalar_select %p239, %s238, 2
        %s241 = smul.u32 4, %s240
        %s242 = smul.u32 %s26, 2
        %s243 = sadd.s32 %s242, %s27
        %p244 = scmp.lt.s32.totalorder %s243, 2
        %s245 = scalar_select %p244, %s243, 2
        %p248 = scmp.eq.s32.totalorder %s27, 0
        // Predicated region
        $region37: #{tpu_custom_call.1} parent=27 // pred_check
          %p249 = pneg %p248
        $region38: #{tpu_custom_call.1} parent=27 // pred_check_branch
          %251 = sbr.rel (%p249) target = $region40
        $region39: #{tpu_custom_call.1} parent=27 // pred_region
          %252 = vst [vmem:[%s236] sm:$0xff] 0.0
          %253 = vst [vmem:[%s236 + $0x8] sm:$0xff] 0.0
        $region40: #{tpu_custom_call.1} parent=27 // pred_fallthru
          _
        %s254 = smul.u32 %s26, 2
        %s255 = sadd.s32 %s254, %s27
        %p256 = scmp.lt.s32.totalorder %s255, 3
        // Predicated region
        $region41: #{tpu_custom_call.1} parent=27 // pred_check
          %p257 = pneg %p256
        $region42: #{tpu_custom_call.1} parent=27 // pred_check_branch
          %259 = sbr.rel (%p257) target = $region44
        $region43: #{tpu_custom_call.1} parent=27 // pred_region
          %v260 = vld [vmem:[%s202] sm:$0xff]
          %v261 = vld [vmem:[%s202 + $0x8] sm:$0xff]
          %v262 = vld [vmem:[%s202 + $0x10] sm:$0xff]
          %v263 = vld [vmem:[%s202 + $0x18] sm:$0xff]
          %v264 = vld [vmem:[%s202 + $0x20] sm:$0xff]
          %v265 = vld [vmem:[%s202 + $0x28] sm:$0xff]
          %v266 = vld [vmem:[%s202 + $0x30] sm:$0xff]
          %v267 = vld [vmem:[%s202 + $0x38] sm:$0xff]
          %v268 = vld [vmem:[%s211] sm:$0xff]
          %v269 = vld [vmem:[%s211 + $0x8] sm:$0xff]
          %vm270 = vnez %v268
          %vm271 = vnez %v269
          %v272 = vsel %vm270, 16843009, 0
          %v273 = vsel %vm271, 16843009, 0
          %v274 = vunpack.c.0.s8 %v272
          %v275 = vunpack.c.0.s8 %v273
          %v276 = vunpack.c.1.s8 %v272
          %v277 = vunpack.c.1.s8 %v273
          %v278 = vunpack.c.2.s8 %v272
          %v279 = vunpack.c.2.s8 %v273
          %v280 = vunpack.c.3.s8 %v272
          %v281 = vunpack.c.3.s8 %v273
          %v282 = vpack.c.b16 %v275, %v274
          %v283 = vpack.c.b8 %v282, %v282
          %v284 = vpack.c.b16 %v277, %v276
          %v285 = vpack.c.b8 %v284, %v284
          %v286 = vpack.c.b16 %v279, %v278
          %v287 = vpack.c.b8 %v286, %v286
          %v288 = vpack.c.b16 %v281, %v280
          %v289 = vpack.c.b8 %v288, %v288
          %vm290 = vnez %v283
          %vm291 = vnez %v285
          %vm292 = vnez %v287
          %vm293 = vnez %v289
          %v294 = vsel %vm290, 16843009, 0
          %v295 = vsel %vm291, 16843009, 0
          %v296 = vsel %vm292, 16843009, 0
          %v297 = vsel %vm293, 16843009, 0
          %v298 = vunpack.c.0.s8 %v294
          %v299 = vunpack.c.1.s8 %v294
          %v300 = vunpack.c.0.s8 %v295
          %v301 = vunpack.c.1.s8 %v295
          %v302 = vunpack.c.0.s8 %v296
          %v303 = vunpack.c.1.s8 %v296
          %v304 = vunpack.c.0.s8 %v297
          %v305 = vunpack.c.1.s8 %v297
          %vm306 = vcmp.ne.s32.totalorder %v298, 0
          %vm307 = vcmp.ne.s32.totalorder %v299, 0
          %vm308 = vcmp.ne.s32.totalorder %v300, 0
          %vm309 = vcmp.ne.s32.totalorder %v301, 0
          %vm310 = vcmp.ne.s32.totalorder %v302, 0
          %vm311 = vcmp.ne.s32.totalorder %v303, 0
          %vm312 = vcmp.ne.s32.totalorder %v304, 0
          %vm313 = vcmp.ne.s32.totalorder %v305, 0
          %v314 = vsel %vm306, %v260, 0.0
          %v315 = vsel %vm307, %v261, 0.0
          %v316 = vsel %vm308, %v262, 0.0
          %v317 = vsel %vm309, %v263, 0.0
          %v318 = vsel %vm310, %v264, 0.0
          %v319 = vsel %vm311, %v265, 0.0
          %v320 = vsel %vm312, %v266, 0.0
          %v321 = vsel %vm313, %v267, 0.0
          %v322 = vmax.f32 %v260, 0.0
          %v323 = vmax.f32 %v261, 0.0
          %v324 = vmax.f32 %v262, 0.0
          %v325 = vmax.f32 %v263, 0.0
          %v326 = vmax.f32 %v264, 0.0
          %v327 = vmax.f32 %v265, 0.0
          %v328 = vmax.f32 %v266, 0.0
          %v329 = vmax.f32 %v267, 0.0
          %v330 = vsub.f32 %v322, %v314
          %v331 = vsub.f32 %v323, %v315
          %v332 = vsub.f32 %v324, %v316
          %v333 = vsub.f32 %v325, %v317
          %v334 = vsub.f32 %v326, %v318
          %v335 = vsub.f32 %v327, %v319
          %v336 = vsub.f32 %v328, %v320
          %v337 = vsub.f32 %v329, %v321
          %v338 = vand.u32 2147483647, %v260
          %v339 = vand.u32 2147483647, %v261
          %v340 = vand.u32 2147483647, %v262
          %v341 = vand.u32 2147483647, %v263
          %v342 = vand.u32 2147483647, %v264
          %v343 = vand.u32 2147483647, %v265
          %v344 = vand.u32 2147483647, %v266
          %v345 = vand.u32 2147483647, %v267
          %v346 = vsub.f32 0.0, %v338
          %v347 = vsub.f32 0.0, %v339
          %v348 = vsub.f32 0.0, %v340
          %v349 = vsub.f32 0.0, %v341
          %v350 = vsub.f32 0.0, %v342
          %v351 = vsub.f32 0.0, %v343
          %v352 = vsub.f32 0.0, %v344
          %v353 = vsub.f32 0.0, %v345
          %v354 = vmul.f32 %v346, 1.442695
          %v355 = vpow.pop %v354
          %v356 = vmul.f32 %v347, 1.442695
          %v357 = vpow.pop %v356
          %v358 = vmul.f32 %v348, 1.442695
          %v359 = vpow.pop %v358
          %v360 = vmul.f32 %v349, 1.442695
          %v361 = vpow.pop %v360
          %v362 = vmul.f32 %v350, 1.442695
          %v363 = vpow.pop %v362
          %v364 = vmul.f32 %v351, 1.442695
          %v365 = vpow.pop %v364
          %v366 = vmul.f32 %v352, 1.442695
          %v367 = vpow.pop %v366
          %v368 = vmul.f32 %v353, 1.442695
          %v369 = vpow.pop %v368
          %v370 = vadd.f32 %v355, 1.0
          %v371 = vlog2.pop %v370
          %v372 = vmul.f32 %v371, 0.6931472
          %v373 = vmul.f32 -0.5, %v355
          %v374 = vadd.f32 %v373, 1.0
          %v375 = vmul.f32 %v374, %v355
          %v376 = vand.u32 2147483647, %v355
          %vm377 = vcmp.lt.f32.partialorder %v376, 0.0004427343
          %v378 = vsel %vm377, %v375, %v372
          %v379 = vadd.f32 %v357, 1.0
          %v380 = vlog2.pop %v379
          %v381 = vmul.f32 %v380, 0.6931472
          %v382 = vmul.f32 -0.5, %v357
          %v383 = vadd.f32 %v382, 1.0
          %v384 = vmul.f32 %v383, %v357
          %v385 = vand.u32 2147483647, %v357
          %vm386 = vcmp.lt.f32.partialorder %v385, 0.0004427343
          %v387 = vsel %vm386, %v384, %v381
          %v388 = vadd.f32 %v359, 1.0
          %v389 = vlog2.pop %v388
          %v390 = vmul.f32 %v389, 0.6931472
          %v391 = vmul.f32 -0.5, %v359
          %v392 = vadd.f32 %v391, 1.0
          %v393 = vmul.f32 %v392, %v359
          %v394 = vand.u32 2147483647, %v359
          %vm395 = vcmp.lt.f32.partialorder %v394, 0.0004427343
          %v396 = vsel %vm395, %v393, %v390
          %v397 = vadd.f32 %v361, 1.0
          %v398 = vlog2.pop %v397
          %v399 = vmul.f32 %v398, 0.6931472
          %v400 = vmul.f32 -0.5, %v361
          %v401 = vadd.f32 %v400, 1.0
          %v402 = vmul.f32 %v401, %v361
          %v403 = vand.u32 2147483647, %v361
          %vm404 = vcmp.lt.f32.partialorder %v403, 0.0004427343
          %v405 = vsel %vm404, %v402, %v399
          %v406 = vadd.f32 %v363, 1.0
          %v407 = vlog2.pop %v406
          %v408 = vmul.f32 %v407, 0.6931472
          %v409 = vmul.f32 -0.5, %v363
          %v410 = vadd.f32 %v409, 1.0
          %v411 = vmul.f32 %v410, %v363
          %v412 = vand.u32 2147483647, %v363
          %vm413 = vcmp.lt.f32.partialorder %v412, 0.0004427343
          %v414 = vsel %vm413, %v411, %v408
          %v415 = vadd.f32 %v365, 1.0
          %v416 = vlog2.pop %v415
          %v417 = vmul.f32 %v416, 0.6931472
          %v418 = vmul.f32 -0.5, %v365
          %v419 = vadd.f32 %v418, 1.0
          %v420 = vmul.f32 %v419, %v365
          %v421 = vand.u32 2147483647, %v365
          %vm422 = vcmp.lt.f32.partialorder %v421, 0.0004427343
          %v423 = vsel %vm422, %v420, %v417
          %v424 = vadd.f32 %v367, 1.0
          %v425 = vlog2.pop %v424
          %v426 = vmul.f32 %v425, 0.6931472
          %v427 = vmul.f32 -0.5, %v367
          %v428 = vadd.f32 %v427, 1.0
          %v429 = vmul.f32 %v428, %v367
          %v430 = vand.u32 2147483647, %v367
          %vm431 = vcmp.lt.f32.partialorder %v430, 0.0004427343
          %v432 = vsel %vm431, %v429, %v426
          %v433 = vadd.f32 %v369, 1.0
          %v434 = vlog2.pop %v433
          %v435 = vmul.f32 %v434, 0.6931472
          %v436 = vmul.f32 -0.5, %v369
          %v437 = vadd.f32 %v436, 1.0
          %v438 = vmul.f32 %v437, %v369
          %v439 = vand.u32 2147483647, %v369
          %vm440 = vcmp.lt.f32.partialorder %v439, 0.0004427343
          %v441 = vsel %vm440, %v438, %v435
          %v442 = vadd.f32 %v330, %v378
          %v443 = vadd.f32 %v331, %v387
          %v444 = vadd.f32 %v332, %v396
          %v445 = vadd.f32 %v333, %v405
          %v446 = vadd.f32 %v334, %v414
          %v447 = vadd.f32 %v335, %v423
          %v448 = vadd.f32 %v336, %v432
          %v449 = vadd.f32 %v337, %v441
          %v450 = vadd.f32 %v442, %v444
          %v451 = vadd.f32 %v443, %v445
          %v452 = vadd.f32 %v450, %v446
          %v453 = vadd.f32 %v451, %v447
          %v454 = vadd.f32 %v452, %v448
          %v455 = vadd.f32 %v453, %v449
          %v456 = vld [vmem:[%s236] sm:$0xff]
          %v457 = vld [vmem:[%s236 + $0x8] sm:$0xff]
          %v458 = vadd.f32 %v456, %v454
          %v459 = vadd.f32 %v457, %v455
          %460 = vst [vmem:[%s236] sm:$0xff] %v458
          %461 = vst [vmem:[%s236 + $0x8] sm:$0xff] %v459
        $region44: #{tpu_custom_call.1} parent=27 // pred_fallthru
          _
        %s462 = sand.u32 %s110, 1
        %s463 = scalar_lea.sflag [#allocation4], %s462
        %s464 = sand.u32 %s110, 1
        %s465 = smul.addr %s464, 16
        %s466 = scalar_lea.vmem [#allocation7], %s465
        // Predicated region
        $region45: #{tpu_custom_call.1} parent=27 // pred_check
          %p467 = pneg %p120
        $region46: #{tpu_custom_call.1} parent=27 // pred_check_branch
          %469 = sbr.rel (%p467) target = $region48
        $region47: #{tpu_custom_call.1} parent=27 // pred_region
          %s471 = ssub.s32 256, 256
          %472 = vsyncadd %s463, %s471
          %s473 = smul.addr %s26, 2
          %s474 = smul.addr %s473, 128
          %s475 = scalar_lea.hbm %s2, %s474
          %s477 = sshll.u32 %s466, 4
          %s478 = int_to_ptr.vmem [resolvable:$true] %s477
          %480 = dma.vmem_to_hbm [thread:$0]  %s478, 256, %s475, %s463
        $region48: #{tpu_custom_call.1} parent=27 // pred_fallthru
          _
      $region28: #{tpu_custom_call.1} parent=5 // pred_fallthru
        _
      %p481 = scmp.le.s32.totalorder 2, %s17
      // Predicated region
      $region49: #{tpu_custom_call.1} parent=5 // pred_check
        %p482 = pneg %p481
      $region50: #{tpu_custom_call.1} parent=5 // pred_check_branch
        %484 = sbr.rel (%p482) target = $region52
      $region51: #{tpu_custom_call.1} parent=5 // pred_region
        %s485 = ssub.s32 %s17, 2
        // Predicated region
        $region53: #{tpu_custom_call.1} parent=51 // pred_check
          %p486 = pneg %p126
        $region54: #{tpu_custom_call.1} parent=51 // pred_check_branch
          %488 = sbr.rel (%p486) target = $region56
        $region55: #{tpu_custom_call.1} parent=51 // pred_region
          %s489 = sand.u32 %s111, 1
          %s490 = scalar_lea.sflag [#allocation4], %s489
          %s491 = sand.u32 %s111, 1
          %s492 = smul.addr %s491, 16
          %s493 = scalar_lea.vmem [#allocation7], %s492
          %494 = dma.done %s490, 256
        $region56: #{tpu_custom_call.1} parent=51 // pred_fallthru
          _
      $region52: #{tpu_custom_call.1} parent=5 // pred_fallthru
        _
    $region6: #{tpu_custom_call.1} parent=1 // loop_footer
      %s21 = sadd.s32 1, %s17
    $region7: #{tpu_custom_call.1} parent=1 // loop_footer_branch
      %16 = sbr.rel target = $region3
    $region8: #{tpu_custom_call.1} parent=1 // loop_exit
      _
    %495 = vsyncpa [#allocation3], 1
    %s496 = scalar_lea.sflag [#allocation3], 1
    %497 = vsyncpa %s496, 1
    %498 = vsyncpa [#allocation6], 1
    %s499 = scalar_lea.sflag [#allocation6], 1
    %500 = vsyncpa %s499, 1
    %501 = vsyncpa [#allocation4], 1
    %s502 = scalar_lea.sflag [#allocation4], 1
    %503 = vsyncpa %s502, 1

</llo_original>
